<compile_context>
chip_gen: v7x
topology: tpu7x:2x2x1
jax: 0.10.0
libtpu: 0.0.40
codegen_flags: <defaults>
</compile_context>

<pallas_src>
import functools

import jax
import jax.numpy as jnp
from jax.experimental import pallas as pl
from jax.experimental.pallas import tpu as pltpu


def _leaky_relu(x, slope=0.2):
    return jnp.where(x > 0, x, slope * x)


def _layer_norm(x, gamma, beta, eps=1e-5):
    mu = jnp.mean(x, axis=-1, keepdims=True)
    var = jnp.mean((x - mu) ** 2, axis=-1, keepdims=True)
    return (x - mu) * jax.lax.rsqrt(var + eps) * gamma + beta


def classification_kernel(
    x_ref,
    w1_ref, b1_ref, ln1_ref,
    w2_ref, b2_ref, ln2_ref,
    w3_ref, b3_ref,
    out_ref,
):
    x = x_ref[...]                                           # (Bt, hidden)

    # ---- Linear(hidden, mid) + LayerNorm(mid) + LeakyReLU(0.2) ----
    h = jnp.dot(x, w1_ref[...], preferred_element_type=jnp.float32) + b1_ref[...]
    h = _leaky_relu(_layer_norm(h, ln1_ref[0:1, :], ln1_ref[1:2, :]))

    # ---- Linear(mid, class_dim) + LayerNorm(class_dim) + LeakyReLU(0.2) ----
    h = jnp.dot(h, w2_ref[...], preferred_element_type=jnp.float32) + b2_ref[...]
    h = _leaky_relu(_layer_norm(h, ln2_ref[0:1, :], ln2_ref[1:2, :]))

    # ---- Linear(class_dim, 2) + Softmax(dim=-1) ----
    logits = jnp.dot(h, w3_ref[...], preferred_element_type=jnp.float32) + b3_ref[...]
    m = jnp.max(logits, axis=-1, keepdims=True)
    e = jnp.exp(logits - m)
    out_ref[...] = e / jnp.sum(e, axis=-1, keepdims=True)    # (Bt, 2)


def _round_up(x, m):
    return ((x + m - 1) // m) * m


def classification_forward(x, params, *, block_b=128):
    """x: (B, hidden) float32 -> (B, 2) softmax probabilities."""
    B, hidden = x.shape
    mid = params["w1"].shape[1]        # int(class_dim * 1.5)
    cdim = params["w2"].shape[1]       # class_dim
    out_dim = params["w3"].shape[1]    # 2

    # Batch tile: up to 128 rows per grid step, padded to a sublane multiple.
    Bt = min(block_b, _round_up(B, 8))
    B_pad = _round_up(B, Bt)
    if B_pad != B:
        x = jnp.pad(x, ((0, B_pad - B), (0, 0)))

    const = lambda b: (0, 0)
    grid_spec = pltpu.PrefetchScalarGridSpec(
        num_scalar_prefetch=0,
        grid=(B_pad // Bt,),
        in_specs=[
            pl.BlockSpec((Bt, hidden), lambda b: (b, 0)),
            pl.BlockSpec((hidden, mid), const),
            pl.BlockSpec((1, mid), const),
            pl.BlockSpec((2, mid), const),
            pl.BlockSpec((mid, cdim), const),
            pl.BlockSpec((1, cdim), const),
            pl.BlockSpec((2, cdim), const),
            pl.BlockSpec((cdim, out_dim), const),
            pl.BlockSpec((1, out_dim), const),
        ],
        out_specs=pl.BlockSpec((Bt, out_dim), lambda b: (b, 0)),
    )

    out = pl.pallas_call(
        classification_kernel,
        out_shape=jax.ShapeDtypeStruct((B_pad, out_dim), jnp.float32),
        grid_spec=grid_spec,
        compiler_params=pltpu.CompilerParams(
            dimension_semantics=("parallel",)),   # batch tiles are independent
    )(x,
      params["w1"], params["b1"], params["ln1"],
      params["w2"], params["b2"], params["ln2"],
      params["w3"], params["b3"])
    return out[:B]


def classification_reference(x, params):
    """Pure-JAX reference mirroring the PyTorch module (eval mode)."""
    h = x @ params["w1"] + params["b1"]
    h = _leaky_relu(_layer_norm(h, params["ln1"][0:1, :], params["ln1"][1:2, :]))
    h = h @ params["w2"] + params["b2"]
    h = _leaky_relu(_layer_norm(h, params["ln2"][0:1, :], params["ln2"][1:2, :]))
    logits = h @ params["w3"] + params["b3"]
    return jax.nn.softmax(logits, axis=-1)


if __name__ == "__main__":
    # ClassificationModel(hidden_dim=32, class_dim=16, class_n=2)
    B, hidden_dim, class_dim = 2, 32, 16
    mid = int(class_dim * 1.5)          # = 24
    out_dim = 2                         # final Linear(class_dim, 2)

    key = jax.random.PRNGKey(0)
    keys = jax.random.split(key, 8)
    s = 0.1
    params = {
        # Linear weights stored pre-transposed as (in, out); biases as (1, out).
        "w1": jax.random.normal(keys[0], (hidden_dim, mid), jnp.float32) * s,
        "b1": jax.random.normal(keys[1], (1, mid), jnp.float32) * s,
        # LayerNorm params stacked as rows: [gamma, beta].
        "ln1": jnp.stack([jnp.ones((mid,), jnp.float32),
                          jnp.zeros((mid,), jnp.float32)]),
        "w2": jax.random.normal(keys[2], (mid, class_dim), jnp.float32) * s,
        "b2": jax.random.normal(keys[3], (1, class_dim), jnp.float32) * s,
        "ln2": jnp.stack([jnp.ones((class_dim,), jnp.float32),
                          jnp.zeros((class_dim,), jnp.float32)]),
        "w3": jax.random.normal(keys[4], (class_dim, out_dim), jnp.float32) * s,
        "b3": jax.random.normal(keys[5], (1, out_dim), jnp.float32) * s,
    }

    x = jax.random.normal(keys[6], (B, hidden_dim), jnp.float32)

    y = classification_forward(x, params)
    y = jax.block_until_ready(y)

    assert y.shape == (B, out_dim) and y.dtype == jnp.float32
    # Softmax rows must sum to 1 and match the pure-JAX reference.
    assert jnp.allclose(jnp.sum(y, axis=-1), 1.0, atol=1e-5)
    y_ref = classification_reference(x, params)
    assert jnp.allclose(y, y_ref, atol=1e-5, rtol=1e-5)

    # NOTE: ClassificationModel.lstm(...) is a data-selection helper not used by
    # forward(); it is intentionally not implemented here.
    print("KERNEL_OK")
</pallas_src>

<mosaic_0001>
module attributes {stable_mosaic.version = 11 : i64} {
  func.func @classification_kernel(%arg0: i32, %arg1: memref<8x32xf32, #tpu.memory_space<vmem>>, %arg2: memref<32x24xf32, #tpu.memory_space<vmem>>, %arg3: memref<1x24xf32, #tpu.memory_space<vmem>>, %arg4: memref<2x24xf32, #tpu.memory_space<vmem>>, %arg5: memref<24x16xf32, #tpu.memory_space<vmem>>, %arg6: memref<1x16xf32, #tpu.memory_space<vmem>>, %arg7: memref<2x16xf32, #tpu.memory_space<vmem>>, %arg8: memref<16x2xf32, #tpu.memory_space<vmem>>, %arg9: memref<1x2xf32, #tpu.memory_space<vmem>>, %arg10: memref<8x2xf32, #tpu.memory_space<vmem>>) attributes {dimension_semantics = [#tpu.dimension_semantics<parallel>], iteration_bounds = array<i64: 1>, scalar_prefetch = 0 : i64, scratch_operands = 0 : i64, tpu.core_type = #tpu.core_type<tc>, window_params = [{transform_indices = @transform_0, window_bounds = array<i64: 8, 32>}, {pipeline_mode = #tpu.pipeline_mode<synchronous>, transform_indices = @transform_1, window_bounds = array<i64: 32, 24>}, {pipeline_mode = #tpu.pipeline_mode<synchronous>, transform_indices = @transform_2, window_bounds = array<i64: 1, 24>}, {pipeline_mode = #tpu.pipeline_mode<synchronous>, transform_indices = @transform_3, window_bounds = array<i64: 2, 24>}, {pipeline_mode = #tpu.pipeline_mode<synchronous>, transform_indices = @transform_4, window_bounds = array<i64: 24, 16>}, {pipeline_mode = #tpu.pipeline_mode<synchronous>, transform_indices = @transform_5, window_bounds = array<i64: 1, 16>}, {pipeline_mode = #tpu.pipeline_mode<synchronous>, transform_indices = @transform_6, window_bounds = array<i64: 2, 16>}, {pipeline_mode = #tpu.pipeline_mode<synchronous>, transform_indices = @transform_7, window_bounds = array<i64: 16, 2>}, {pipeline_mode = #tpu.pipeline_mode<synchronous>, transform_indices = @transform_8, window_bounds = array<i64: 1, 2>}, {transform_indices = @transform_9, window_bounds = array<i64: 8, 2>}]} {
    %c0 = arith.constant 0 : index
    %c0_0 = arith.constant 0 : index
    %0 = vector.load %arg1[%c0, %c0_0] : memref<8x32xf32, #tpu.memory_space<vmem>>, vector<8x32xf32>
    %c0_1 = arith.constant 0 : index
    %c0_2 = arith.constant 0 : index
    %1 = vector.load %arg2[%c0_1, %c0_2] : memref<32x24xf32, #tpu.memory_space<vmem>>, vector<32x24xf32>
    %cst = arith.constant dense<0.000000e+00> : vector<8x24xf32>
    %2 = tpu.matmul %0, %1, %cst {dimension_numbers = #tpu.dot_dimension_numbers<[1], [0], [0], [1], [0, 0, 1, 1], [], []>} : vector<8x32xf32>, vector<32x24xf32>, vector<8x24xf32> -> vector<8x24xf32>
    %c0_3 = arith.constant 0 : index
    %c0_4 = arith.constant 0 : index
    %3 = vector.load %arg3[%c0_3, %c0_4] : memref<1x24xf32, #tpu.memory_space<vmem>>, vector<1x24xf32>
    %4 = vector.broadcast %3 : vector<1x24xf32> to vector<8x24xf32>
    %5 = arith.addf %2, %4 : vector<8x24xf32>
    %c0_5 = arith.constant 0 : index
    %c0_6 = arith.constant 0 : index
    %6 = vector.load %arg4[%c0_5, %c0_6] : memref<2x24xf32, #tpu.memory_space<vmem>>, vector<1x24xf32>
    %c1 = arith.constant 1 : index
    %c0_7 = arith.constant 0 : index
    %7 = vector.load %arg4[%c1, %c0_7] : memref<2x24xf32, #tpu.memory_space<vmem>>, vector<1x24xf32>
    %cst_8 = arith.constant dense<0.000000e+00> : vector<8xf32>
    %8 = vector.multi_reduction <add>, %5, %cst_8 [1] : vector<8x24xf32> to vector<8xf32>
    %9 = vector.shape_cast %8 : vector<8xf32> to vector<8x1xf32>
    %cst_9 = arith.constant 2.400000e+01 : f32
    %10 = vector.broadcast %cst_9 : f32 to vector<8x1xf32>
    %11 = arith.divf %9, %10 : vector<8x1xf32>
    %12 = vector.broadcast %11 : vector<8x1xf32> to vector<8x24xf32>
    %13 = arith.subf %5, %12 : vector<8x24xf32>
    %14 = arith.mulf %13, %13 : vector<8x24xf32>
    %cst_10 = arith.constant dense<0.000000e+00> : vector<8xf32>
    %15 = vector.multi_reduction <add>, %14, %cst_10 [1] : vector<8x24xf32> to vector<8xf32>
    %16 = vector.shape_cast %15 : vector<8xf32> to vector<8x1xf32>
    %cst_11 = arith.constant 2.400000e+01 : f32
    %17 = vector.broadcast %cst_11 : f32 to vector<8x1xf32>
    %18 = arith.divf %16, %17 : vector<8x1xf32>
    %19 = vector.broadcast %11 : vector<8x1xf32> to vector<8x24xf32>
    %20 = arith.subf %5, %19 : vector<8x24xf32>
    %cst_12 = arith.constant 9.99999974E-6 : f32
    %21 = vector.broadcast %cst_12 : f32 to vector<8x1xf32>
    %22 = arith.addf %18, %21 : vector<8x1xf32>
    %23 = math.rsqrt %22 : vector<8x1xf32>
    %24 = vector.broadcast %23 : vector<8x1xf32> to vector<8x24xf32>
    %25 = arith.mulf %20, %24 : vector<8x24xf32>
    %26 = vector.broadcast %6 : vector<1x24xf32> to vector<8x24xf32>
    %27 = arith.mulf %25, %26 : vector<8x24xf32>
    %28 = vector.broadcast %7 : vector<1x24xf32> to vector<8x24xf32>
    %29 = arith.addf %27, %28 : vector<8x24xf32>
    %cst_13 = arith.constant 0.000000e+00 : f32
    %30 = vector.broadcast %cst_13 : f32 to vector<8x24xf32>
    %31 = arith.cmpf ogt, %29, %30 : vector<8x24xf32>
    %cst_14 = arith.constant 2.000000e-01 : f32
    %32 = vector.broadcast %cst_14 : f32 to vector<8x24xf32>
    %33 = arith.mulf %32, %29 : vector<8x24xf32>
    %34 = arith.select %31, %29, %33 : vector<8x24xi1>, vector<8x24xf32>
    %c0_15 = arith.constant 0 : index
    %c0_16 = arith.constant 0 : index
    %35 = vector.load %arg5[%c0_15, %c0_16] : memref<24x16xf32, #tpu.memory_space<vmem>>, vector<24x16xf32>
    %cst_17 = arith.constant dense<0.000000e+00> : vector<8x16xf32>
    %36 = tpu.matmul %34, %35, %cst_17 {dimension_numbers = #tpu.dot_dimension_numbers<[1], [0], [0], [1], [0, 0, 1, 1], [], []>} : vector<8x24xf32>, vector<24x16xf32>, vector<8x16xf32> -> vector<8x16xf32>
    %c0_18 = arith.constant 0 : index
    %c0_19 = arith.constant 0 : index
    %37 = vector.load %arg6[%c0_18, %c0_19] : memref<1x16xf32, #tpu.memory_space<vmem>>, vector<1x16xf32>
    %38 = vector.broadcast %37 : vector<1x16xf32> to vector<8x16xf32>
    %39 = arith.addf %36, %38 : vector<8x16xf32>
    %c0_20 = arith.constant 0 : index
    %c0_21 = arith.constant 0 : index
    %40 = vector.load %arg7[%c0_20, %c0_21] : memref<2x16xf32, #tpu.memory_space<vmem>>, vector<1x16xf32>
    %c1_22 = arith.constant 1 : index
    %c0_23 = arith.constant 0 : index
    %41 = vector.load %arg7[%c1_22, %c0_23] : memref<2x16xf32, #tpu.memory_space<vmem>>, vector<1x16xf32>
    %cst_24 = arith.constant dense<0.000000e+00> : vector<8xf32>
    %42 = vector.multi_reduction <add>, %39, %cst_24 [1] : vector<8x16xf32> to vector<8xf32>
    %43 = vector.shape_cast %42 : vector<8xf32> to vector<8x1xf32>
    %cst_25 = arith.constant 1.600000e+01 : f32
    %44 = vector.broadcast %cst_25 : f32 to vector<8x1xf32>
    %45 = arith.divf %43, %44 : vector<8x1xf32>
    %46 = vector.broadcast %45 : vector<8x1xf32> to vector<8x16xf32>
    %47 = arith.subf %39, %46 : vector<8x16xf32>
    %48 = arith.mulf %47, %47 : vector<8x16xf32>
    %cst_26 = arith.constant dense<0.000000e+00> : vector<8xf32>
    %49 = vector.multi_reduction <add>, %48, %cst_26 [1] : vector<8x16xf32> to vector<8xf32>
    %50 = vector.shape_cast %49 : vector<8xf32> to vector<8x1xf32>
    %cst_27 = arith.constant 1.600000e+01 : f32
    %51 = vector.broadcast %cst_27 : f32 to vector<8x1xf32>
    %52 = arith.divf %50, %51 : vector<8x1xf32>
    %53 = vector.broadcast %45 : vector<8x1xf32> to vector<8x16xf32>
    %54 = arith.subf %39, %53 : vector<8x16xf32>
    %cst_28 = arith.constant 9.99999974E-6 : f32
    %55 = vector.broadcast %cst_28 : f32 to vector<8x1xf32>
    %56 = arith.addf %52, %55 : vector<8x1xf32>
    %57 = math.rsqrt %56 : vector<8x1xf32>
    %58 = vector.broadcast %57 : vector<8x1xf32> to vector<8x16xf32>
    %59 = arith.mulf %54, %58 : vector<8x16xf32>
    %60 = vector.broadcast %40 : vector<1x16xf32> to vector<8x16xf32>
    %61 = arith.mulf %59, %60 : vector<8x16xf32>
    %62 = vector.broadcast %41 : vector<1x16xf32> to vector<8x16xf32>
    %63 = arith.addf %61, %62 : vector<8x16xf32>
    %cst_29 = arith.constant 0.000000e+00 : f32
    %64 = vector.broadcast %cst_29 : f32 to vector<8x16xf32>
    %65 = arith.cmpf ogt, %63, %64 : vector<8x16xf32>
    %cst_30 = arith.constant 2.000000e-01 : f32
    %66 = vector.broadcast %cst_30 : f32 to vector<8x16xf32>
    %67 = arith.mulf %66, %63 : vector<8x16xf32>
    %68 = arith.select %65, %63, %67 : vector<8x16xi1>, vector<8x16xf32>
    %c0_31 = arith.constant 0 : index
    %c0_32 = arith.constant 0 : index
    %69 = vector.load %arg8[%c0_31, %c0_32] : memref<16x2xf32, #tpu.memory_space<vmem>>, vector<16x2xf32>
    %cst_33 = arith.constant dense<0.000000e+00> : vector<8x2xf32>
    %70 = tpu.matmul %68, %69, %cst_33 {dimension_numbers = #tpu.dot_dimension_numbers<[1], [0], [0], [1], [0, 0, 1, 1], [], []>} : vector<8x16xf32>, vector<16x2xf32>, vector<8x2xf32> -> vector<8x2xf32>
    %c0_34 = arith.constant 0 : index
    %c0_35 = arith.constant 0 : index
    %71 = vector.load %arg9[%c0_34, %c0_35] : memref<1x2xf32, #tpu.memory_space<vmem>>, vector<1x2xf32>
    %72 = vector.broadcast %71 : vector<1x2xf32> to vector<8x2xf32>
    %73 = arith.addf %70, %72 : vector<8x2xf32>
    %cst_36 = arith.constant dense<0xFF800000> : vector<8xf32>
    %74 = vector.multi_reduction <maximumf>, %73, %cst_36 [1] : vector<8x2xf32> to vector<8xf32>
    %75 = vector.shape_cast %74 : vector<8xf32> to vector<8x1xf32>
    %76 = vector.broadcast %75 : vector<8x1xf32> to vector<8x2xf32>
    %77 = arith.subf %73, %76 : vector<8x2xf32>
    %78 = math.exp %77 : vector<8x2xf32>
    %cst_37 = arith.constant dense<0.000000e+00> : vector<8xf32>
    %79 = vector.multi_reduction <add>, %78, %cst_37 [1] : vector<8x2xf32> to vector<8xf32>
    %80 = vector.shape_cast %79 : vector<8xf32> to vector<8x1xf32>
    %81 = vector.broadcast %80 : vector<8x1xf32> to vector<8x2xf32>
    %82 = arith.divf %78, %81 : vector<8x2xf32>
    %c0_38 = arith.constant 0 : index
    %c0_39 = arith.constant 0 : index
    %83 = vector.load %arg10[%c0_38, %c0_39] : memref<8x2xf32, #tpu.memory_space<vmem>>, vector<8x2xf32>
    tpu.vector_store %arg10[%c0_38, %c0_39], %82 {strides = array<i32>} : memref<8x2xf32, #tpu.memory_space<vmem>>, vector<8x2xf32>,
    return
  }
  func.func @transform_0(%arg0: i32) -> (i32, i32) {
    %c0_i32 = arith.constant 0 : i32
    %c0_i32_0 = arith.constant 0 : i32
    return %arg0, %c0_i32 : i32, i32
  }
  func.func @transform_1(%arg0: i32) -> (i32, i32) {
    %c0_i32 = arith.constant 0 : i32
    %c0_i32_0 = arith.constant 0 : i32
    %c0_i32_1 = arith.constant 0 : i32
    return %c0_i32, %c0_i32_0 : i32, i32
  }
  func.func @transform_2(%arg0: i32) -> (i32, i32) {
    %c0_i32 = arith.constant 0 : i32
    %c0_i32_0 = arith.constant 0 : i32
    %c0_i32_1 = arith.constant 0 : i32
    return %c0_i32, %c0_i32_0 : i32, i32
  }
  func.func @transform_3(%arg0: i32) -> (i32, i32) {
    %c0_i32 = arith.constant 0 : i32
    %c0_i32_0 = arith.constant 0 : i32
    %c0_i32_1 = arith.constant 0 : i32
    return %c0_i32, %c0_i32_0 : i32, i32
  }
  func.func @transform_4(%arg0: i32) -> (i32, i32) {
    %c0_i32 = arith.constant 0 : i32
    %c0_i32_0 = arith.constant 0 : i32
    %c0_i32_1 = arith.constant 0 : i32
    return %c0_i32, %c0_i32_0 : i32, i32
  }
  func.func @transform_5(%arg0: i32) -> (i32, i32) {
    %c0_i32 = arith.constant 0 : i32
    %c0_i32_0 = arith.constant 0 : i32
    %c0_i32_1 = arith.constant 0 : i32
    return %c0_i32, %c0_i32_0 : i32, i32
  }
  func.func @transform_6(%arg0: i32) -> (i32, i32) {
    %c0_i32 = arith.constant 0 : i32
    %c0_i32_0 = arith.constant 0 : i32
    %c0_i32_1 = arith.constant 0 : i32
    return %c0_i32, %c0_i32_0 : i32, i32
  }
  func.func @transform_7(%arg0: i32) -> (i32, i32) {
    %c0_i32 = arith.constant 0 : i32
    %c0_i32_0 = arith.constant 0 : i32
    %c0_i32_1 = arith.constant 0 : i32
    return %c0_i32, %c0_i32_0 : i32, i32
  }
  func.func @transform_8(%arg0: i32) -> (i32, i32) {
    %c0_i32 = arith.constant 0 : i32
    %c0_i32_0 = arith.constant 0 : i32
    %c0_i32_1 = arith.constant 0 : i32
    return %c0_i32, %c0_i32_0 : i32, i32
  }
  func.func @transform_9(%arg0: i32) -> (i32, i32) {
    %c0_i32 = arith.constant 0 : i32
    %c0_i32_0 = arith.constant 0 : i32
    return %arg0, %c0_i32 : i32, i32
  }
}

</mosaic_0001>

<llo_original>
// kernel: tpu_custom_call.1
$region0: #{tpu_custom_call.1}
  #allocation0 [shape = 'u32[]', space=smem, size = 0x4, offset = 0x4, fixed_abs, tag = 'smem constant byte address 0x4 - core index']
  #allocation1 [shape = 'u32[144,128]{1,0:T(1,128)}', space=vmem, size = 0x12000, scoped, tag = 'internal scratch']
  %s0 = inlined_call_operand.vmem [shape: f32[8,32], index: 0, kind: input, shape index: {}]
  %s1 = inlined_call_operand.vmem [shape: f32[32,24], index: 1, kind: input, shape index: {}]
  %s2 = inlined_call_operand.vmem [shape: f32[1,24], index: 2, kind: input, shape index: {}]
  %s3 = inlined_call_operand.vmem [shape: f32[2,24], index: 3, kind: input, shape index: {}]
  %s4 = inlined_call_operand.vmem [shape: f32[24,16], index: 4, kind: input, shape index: {}]
  %s5 = inlined_call_operand.vmem [shape: f32[1,16], index: 5, kind: input, shape index: {}]
  %s6 = inlined_call_operand.vmem [shape: f32[2,16], index: 6, kind: input, shape index: {}]
  %s7 = inlined_call_operand.vmem [shape: f32[16,2], index: 7, kind: input, shape index: {}]
  %s8 = inlined_call_operand.vmem [shape: f32[1,2], index: 8, kind: input, shape index: {}]
  %s9 = inlined_call_operand.vmem [shape: f32[8,2], index: 9, kind: output, shape index: {}]
  %s10 = sld [smem:[#allocation0]]
  $region46: #{tpu_custom_call.1} parent=0
    _
  %s12 = ssub.s32 1, %s10
  %s13 = scalar_select 0, %s12, %s10
  // Predicated region
  $region2: #{tpu_custom_call.1} parent=0 // pred_check
    _
  $region3: #{tpu_custom_call.1} parent=0 // pred_check_branch
    %15 = sbr.rel (0) target = $region5
  $region4: #{tpu_custom_call.1} parent=0 // pred_region
    _
  $region5: #{tpu_custom_call.1} parent=0 // pred_fallthru
    _
  // Predicated region
  $region6: #{tpu_custom_call.1} parent=0 // pred_check
    _
  $region7: #{tpu_custom_call.1} parent=0 // pred_check_branch
    %17 = sbr.rel (0) target = $region9
  $region8: #{tpu_custom_call.1} parent=0 // pred_region
    _
  $region9: #{tpu_custom_call.1} parent=0 // pred_fallthru
    _
  // Predicated region
  $region10: #{tpu_custom_call.1} parent=0 // pred_check
    _
  $region11: #{tpu_custom_call.1} parent=0 // pred_check_branch
    %19 = sbr.rel (0) target = $region13
  $region12: #{tpu_custom_call.1} parent=0 // pred_region
    _
  $region13: #{tpu_custom_call.1} parent=0 // pred_fallthru
    _
  // Predicated region
  $region14: #{tpu_custom_call.1} parent=0 // pred_check
    _
  $region15: #{tpu_custom_call.1} parent=0 // pred_check_branch
    %21 = sbr.rel (0) target = $region17
  $region16: #{tpu_custom_call.1} parent=0 // pred_region
    _
  $region17: #{tpu_custom_call.1} parent=0 // pred_fallthru
    _
  // Predicated region
  $region18: #{tpu_custom_call.1} parent=0 // pred_check
    _
  $region19: #{tpu_custom_call.1} parent=0 // pred_check_branch
    %23 = sbr.rel (0) target = $region21
  $region20: #{tpu_custom_call.1} parent=0 // pred_region
    _
  $region21: #{tpu_custom_call.1} parent=0 // pred_fallthru
    _
  // Predicated region
  $region22: #{tpu_custom_call.1} parent=0 // pred_check
    _
  $region23: #{tpu_custom_call.1} parent=0 // pred_check_branch
    %25 = sbr.rel (0) target = $region25
  $region24: #{tpu_custom_call.1} parent=0 // pred_region
    _
  $region25: #{tpu_custom_call.1} parent=0 // pred_fallthru
    _
  // Predicated region
  $region26: #{tpu_custom_call.1} parent=0 // pred_check
    _
  $region27: #{tpu_custom_call.1} parent=0 // pred_check_branch
    %27 = sbr.rel (0) target = $region29
  $region28: #{tpu_custom_call.1} parent=0 // pred_region
    _
  $region29: #{tpu_custom_call.1} parent=0 // pred_fallthru
    _
  // Predicated region
  $region30: #{tpu_custom_call.1} parent=0 // pred_check
    _
  $region31: #{tpu_custom_call.1} parent=0 // pred_check_branch
    %29 = sbr.rel (0) target = $region33
  $region32: #{tpu_custom_call.1} parent=0 // pred_region
    _
  $region33: #{tpu_custom_call.1} parent=0 // pred_fallthru
    _
  // Predicated region
  $region34: #{tpu_custom_call.1} parent=0 // pred_check
    _
  $region35: #{tpu_custom_call.1} parent=0 // pred_check_branch
    %31 = sbr.rel (0) target = $region37
  $region36: #{tpu_custom_call.1} parent=0 // pred_region
    _
  $region37: #{tpu_custom_call.1} parent=0 // pred_fallthru
    _
  %v32 = vld [vmem:[%s0] sm:$0xff]
  %v33 = vld [vmem:[%s1] sm:$0xff]
  %v34 = vld [vmem:[%s1 + $0x8] sm:$0xff]
  %v35 = vld [vmem:[%s1 + $0x10] sm:$0xff]
  %v36 = vld [vmem:[%s1 + $0x18] sm:$0xff]
  %v37 = vld [vmem:[%s2] sm:$0x1]
  %v39 = vlaneseq
  %v40 = vshrl.u32 %v39, 7
  %v41 = vsub.s32 0, %v40
  %v42 = vrot.slane %v37, %v41
  %vm44 = vcmask 261120
  %v46 = vsel %vm44, %v32, 0
  %48 = vmatprep.subr.mxu0 0.0
  %49 = vmatpush1.msra.mxu0 %v33
  %50 = vmatprep.subr.mxu0 0.0
  %51 = vmatpush1.msra.mxu0 %v34
  %52 = vmatprep.subr.mxu0 0.0
  %53 = vmatpush1.msra.mxu0 %v35
  %54 = vmatprep.subr.mxu0 0.0
  %55 = vmatpush1.msra.mxu0 %v36
  %56 = vmatprep.subr.mxu0 0.0
  %57 = vmatpush1.msra.mxu0 0.0
  %58 = vmatprep.subr.mxu0 0.0
  %59 = vmatpush1.msra.mxu0 0.0
  %60 = vmatprep.subr.mxu0 0.0
  %61 = vmatpush1.msra.mxu0 0.0
  %62 = vmatprep.subr.mxu0 0.0
  %63 = vmatpush1.msra.mxu0 0.0
  %64 = vmatprep.subr.mxu0 0.0
  %65 = vmatpush1.msra.mxu0 0.0
  %66 = vmatprep.subr.mxu0 0.0
  %67 = vmatpush1.msra.mxu0 0.0
  %68 = vmatprep.subr.mxu0 0.0
  %69 = vmatpush1.msra.mxu0 0.0
  %70 = vmatprep.subr.mxu0 0.0
  %71 = vmatpush1.msra.mxu0 0.0
  %72 = vmatprep.subr.mxu0 0.0
  %73 = vmatpush1.msra.mxu0 0.0
  %74 = vmatprep.subr.mxu0 0.0
  %75 = vmatpush1.msra.mxu0 0.0
  %76 = vmatprep.subr.mxu0 0.0
  %77 = vmatpush1.msra.mxu0 0.0
  %78 = vmatprep.subr.mxu0 0.0
  %79 = vmatpush1.msra.mxu0 0.0
  %80 = vmatprep.subr.mxu0 0.0
  %81 = vmatpush1.msra.mxu0 0.0
  %82 = vmatprep.subr.mxu0 0.0
  %83 = vmatpush1.msra.mxu0 0.0
  %84 = vmatprep.subr.mxu0 0.0
  %85 = vmatpush1.msra.mxu0 0.0
  %86 = vmatprep.subr.mxu0 0.0
  %87 = vmatpush1.msra.mxu0 0.0
  %88 = vmatprep.subr.mxu0 0.0
  %89 = vmatpush1.msra.mxu0 0.0
  %90 = vmatprep.subr.mxu0 0.0
  %91 = vmatpush1.msra.mxu0 0.0
  %92 = vmatprep.subr.mxu0 0.0
  %93 = vmatpush1.msra.mxu0 0.0
  %94 = vmatprep.subr.mxu0 0.0
  %95 = vmatpush1.msra.mxu0 0.0
  %96 = vmatprep.subr.mxu0 0.0
  %97 = vmatpush1.msra.mxu0 0.0
  %98 = vmatprep.subr.mxu0 0.0
  %99 = vmatpush1.msra.mxu0 0.0
  %100 = vmatprep.subr.mxu0 0.0
  %101 = vmatpush1.msra.mxu0 0.0
  %102 = vmatprep.subr.mxu0 0.0
  %103 = vmatpush1.msra.mxu0 0.0
  %104 = vmatprep.subr.mxu0 0.0
  %105 = vmatpush1.msra.mxu0 0.0
  %106 = vmatprep.subr.mxu0 0.0
  %107 = vmatpush1.msra.mxu0 0.0
  %108 = vmatprep.subr.mxu0 0.0
  %109 = vmatpush1.msra.mxu0 0.0
  %110 = vmatprep.subr.mxu0 0.0
  %111 = vmatpush1.msra.mxu0 0.0
  %112 = vmatprep.mubr.f32.mxu0 0.0
  %113 = vmatmul.mubr.f32.gmra.mrb[0].mxu0 %v46
  %v114 = vpop.f32.mrb[0].mxu0
  %v115 = vadd.f32 %v42, %v114
  %v116 = vpop.f32.mrb[0].mxu0
  %117 = vdwg.mxu0
  %v118 = vld [vmem:[%s3] sm:$0x1]
  %v119 = vld [vmem:[%s3 + $0x1] sm:$0x1]
  %vm120 = vcmask 195584
  %v121 = vsel %vm120, %v115, 0.0
  %122 = vadd.xlane.f32.xlu0 %v121
  %v123 = vpop.xlane.xlu0 %122
  %v124 = vrcp.pop 24.0
  %v125 = vmul.f32 %v123, %v124
  %v126 = vsub.f32 %v115, %v125
  %v127 = vmul.f32 %v126, %v126
  %v128 = vsel %vm120, %v127, 0.0
  %129 = vadd.xlane.f32.xlu0 %v128
  %v130 = vpop.xlane.xlu0 %129
  %v131 = vmul.f32 %v130, %v124
  %v132 = vadd.f32 %v131, 1e-05
  %v133 = vrsqrt.pop %v132
  %v134 = vmul.f32 %v126, %v133
  %v135 = vlaneseq
  %v136 = vshrl.u32 %v135, 7
  %v137 = vsub.s32 0, %v136
  %v138 = vrot.slane %v118, %v137
  %v139 = vmul.f32 %v134, %v138
  %v140 = vlaneseq
  %v141 = vshrl.u32 %v140, 7
  %v142 = vsub.s32 0, %v141
  %v143 = vrot.slane %v119, %v142
  %v144 = vadd.f32 %v139, %v143
  %vm145 = vcmp.gt.f32.partialorder %v144, 0.0
  %v146 = vmul.f32 %v144, 0.2
  %v147 = vsel %vm145, %v144, %v146
  %v148 = vld [vmem:[%s4] sm:$0xff]
  %v149 = vld [vmem:[%s4 + $0x8] sm:$0xff]
  %v150 = vld [vmem:[%s4 + $0x10] sm:$0xff]
  %v151 = vld [vmem:[%s5] sm:$0x1]
  %v153 = vlaneseq
  %v154 = vshrl.u32 %v153, 7
  %v155 = vsub.s32 0, %v154
  %v156 = vrot.slane %v151, %v155
  %v159 = vsel %vm120, %v147, 0
  %161 = vmatprep.subr.mxu0 0.0
  %162 = vmatpush1.msra.mxu0 %v148
  %163 = vmatprep.subr.mxu0 0.0
  %164 = vmatpush1.msra.mxu0 %v149
  %165 = vmatprep.subr.mxu0 0.0
  %166 = vmatpush1.msra.mxu0 %v150
  %167 = vmatprep.subr.mxu0 0.0
  %168 = vmatpush1.msra.mxu0 0.0
  %169 = vmatprep.subr.mxu0 0.0
  %170 = vmatpush1.msra.mxu0 0.0
  %171 = vmatprep.subr.mxu0 0.0
  %172 = vmatpush1.msra.mxu0 0.0
  %173 = vmatprep.subr.mxu0 0.0
  %174 = vmatpush1.msra.mxu0 0.0
  %175 = vmatprep.subr.mxu0 0.0
  %176 = vmatpush1.msra.mxu0 0.0
  %177 = vmatprep.subr.mxu0 0.0
  %178 = vmatpush1.msra.mxu0 0.0
  %179 = vmatprep.subr.mxu0 0.0
  %180 = vmatpush1.msra.mxu0 0.0
  %181 = vmatprep.subr.mxu0 0.0
  %182 = vmatpush1.msra.mxu0 0.0
  %183 = vmatprep.subr.mxu0 0.0
  %184 = vmatpush1.msra.mxu0 0.0
  %185 = vmatprep.subr.mxu0 0.0
  %186 = vmatpush1.msra.mxu0 0.0
  %187 = vmatprep.subr.mxu0 0.0
  %188 = vmatpush1.msra.mxu0 0.0
  %189 = vmatprep.subr.mxu0 0.0
  %190 = vmatpush1.msra.mxu0 0.0
  %191 = vmatprep.subr.mxu0 0.0
  %192 = vmatpush1.msra.mxu0 0.0
  %193 = vmatprep.subr.mxu0 0.0
  %194 = vmatpush1.msra.mxu0 0.0
  %195 = vmatprep.subr.mxu0 0.0
  %196 = vmatpush1.msra.mxu0 0.0
  %197 = vmatprep.subr.mxu0 0.0
  %198 = vmatpush1.msra.mxu0 0.0
  %199 = vmatprep.subr.mxu0 0.0
  %200 = vmatpush1.msra.mxu0 0.0
  %201 = vmatprep.subr.mxu0 0.0
  %202 = vmatpush1.msra.mxu0 0.0
  %203 = vmatprep.subr.mxu0 0.0
  %204 = vmatpush1.msra.mxu0 0.0
  %205 = vmatprep.subr.mxu0 0.0
  %206 = vmatpush1.msra.mxu0 0.0
  %207 = vmatprep.subr.mxu0 0.0
  %208 = vmatpush1.msra.mxu0 0.0
  %209 = vmatprep.subr.mxu0 0.0
  %210 = vmatpush1.msra.mxu0 0.0
  %211 = vmatprep.subr.mxu0 0.0
  %212 = vmatpush1.msra.mxu0 0.0
  %213 = vmatprep.subr.mxu0 0.0
  %214 = vmatpush1.msra.mxu0 0.0
  %215 = vmatprep.subr.mxu0 0.0
  %216 = vmatpush1.msra.mxu0 0.0
  %217 = vmatprep.subr.mxu0 0.0
  %218 = vmatpush1.msra.mxu0 0.0
  %219 = vmatprep.subr.mxu0 0.0
  %220 = vmatpush1.msra.mxu0 0.0
  %221 = vmatprep.subr.mxu0 0.0
  %222 = vmatpush1.msra.mxu0 0.0
  %223 = vmatprep.subr.mxu0 0.0
  %224 = vmatpush1.msra.mxu0 0.0
  %225 = vmatprep.mubr.f32.mxu0 0.0
  %226 = vmatmul.mubr.f32.gmra.mrb[0].mxu0 %v159
  %v227 = vpop.f32.mrb[0].mxu0
  %v228 = vadd.f32 %v156, %v227
  %v229 = vpop.f32.mrb[0].mxu0
  %230 = vdwg.mxu0
  %v231 = vld [vmem:[%s6] sm:$0x1]
  %v232 = vld [vmem:[%s6 + $0x1] sm:$0x1]
  %vm233 = vcmask 130048
  %v234 = vsel %vm233, %v228, 0.0
  %235 = vadd.xlane.f32.xlu0 %v234
  %v236 = vpop.xlane.xlu0 %235
  %v237 = vrcp.pop 16.0
  %v238 = vmul.f32 %v236, %v237
  %v239 = vsub.f32 %v228, %v238
  %v240 = vmul.f32 %v239, %v239
  %v241 = vsel %vm233, %v240, 0.0
  %242 = vadd.xlane.f32.xlu0 %v241
  %v243 = vpop.xlane.xlu0 %242
  %v244 = vmul.f32 %v243, %v237
  %v245 = vadd.f32 %v244, 1e-05
  %v246 = vrsqrt.pop %v245
  %v247 = vmul.f32 %v239, %v246
  %v248 = vlaneseq
  %v249 = vshrl.u32 %v248, 7
  %v250 = vsub.s32 0, %v249
  %v251 = vrot.slane %v231, %v250
  %v252 = vmul.f32 %v247, %v251
  %v253 = vlaneseq
  %v254 = vshrl.u32 %v253, 7
  %v255 = vsub.s32 0, %v254
  %v256 = vrot.slane %v232, %v255
  %v257 = vadd.f32 %v252, %v256
  %vm258 = vcmp.gt.f32.partialorder %v257, 0.0
  %v259 = vmul.f32 %v257, 0.2
  %v260 = vsel %vm258, %v257, %v259
  %v261 = vld [vmem:[%s7] sm:$0xff]
  %v262 = vld [vmem:[%s7 + $0x8] sm:$0xff]
  %v263 = vld [vmem:[%s8] sm:$0x1]
  %v265 = vlaneseq
  %v266 = vshrl.u32 %v265, 7
  %v267 = vsub.s32 0, %v266
  %v268 = vrot.slane %v263, %v267
  %v271 = vsel %vm233, %v260, 0
  %273 = vmatprep.subr.mxu0 0.0
  %274 = vmatpush1.msra.mxu0 %v261
  %275 = vmatprep.subr.mxu0 0.0
  %276 = vmatpush1.msra.mxu0 %v262
  %277 = vmatprep.subr.mxu0 0.0
  %278 = vmatpush1.msra.mxu0 0.0
  %279 = vmatprep.subr.mxu0 0.0
  %280 = vmatpush1.msra.mxu0 0.0
  %281 = vmatprep.subr.mxu0 0.0
  %282 = vmatpush1.msra.mxu0 0.0
  %283 = vmatprep.subr.mxu0 0.0
  %284 = vmatpush1.msra.mxu0 0.0
  %285 = vmatprep.subr.mxu0 0.0
  %286 = vmatpush1.msra.mxu0 0.0
  %287 = vmatprep.subr.mxu0 0.0
  %288 = vmatpush1.msra.mxu0 0.0
  %289 = vmatprep.subr.mxu0 0.0
  %290 = vmatpush1.msra.mxu0 0.0
  %291 = vmatprep.subr.mxu0 0.0
  %292 = vmatpush1.msra.mxu0 0.0
  %293 = vmatprep.subr.mxu0 0.0
  %294 = vmatpush1.msra.mxu0 0.0
  %295 = vmatprep.subr.mxu0 0.0
  %296 = vmatpush1.msra.mxu0 0.0
  %297 = vmatprep.subr.mxu0 0.0
  %298 = vmatpush1.msra.mxu0 0.0
  %299 = vmatprep.subr.mxu0 0.0
  %300 = vmatpush1.msra.mxu0 0.0
  %301 = vmatprep.subr.mxu0 0.0
  %302 = vmatpush1.msra.mxu0 0.0
  %303 = vmatprep.subr.mxu0 0.0
  %304 = vmatpush1.msra.mxu0 0.0
  %305 = vmatprep.subr.mxu0 0.0
  %306 = vmatpush1.msra.mxu0 0.0
  %307 = vmatprep.subr.mxu0 0.0
  %308 = vmatpush1.msra.mxu0 0.0
  %309 = vmatprep.subr.mxu0 0.0
  %310 = vmatpush1.msra.mxu0 0.0
  %311 = vmatprep.subr.mxu0 0.0
  %312 = vmatpush1.msra.mxu0 0.0
  %313 = vmatprep.subr.mxu0 0.0
  %314 = vmatpush1.msra.mxu0 0.0
  %315 = vmatprep.subr.mxu0 0.0
  %316 = vmatpush1.msra.mxu0 0.0
  %317 = vmatprep.subr.mxu0 0.0
  %318 = vmatpush1.msra.mxu0 0.0
  %319 = vmatprep.subr.mxu0 0.0
  %320 = vmatpush1.msra.mxu0 0.0
  %321 = vmatprep.subr.mxu0 0.0
  %322 = vmatpush1.msra.mxu0 0.0
  %323 = vmatprep.subr.mxu0 0.0
  %324 = vmatpush1.msra.mxu0 0.0
  %325 = vmatprep.subr.mxu0 0.0
  %326 = vmatpush1.msra.mxu0 0.0
  %327 = vmatprep.subr.mxu0 0.0
  %328 = vmatpush1.msra.mxu0 0.0
  %329 = vmatprep.subr.mxu0 0.0
  %330 = vmatpush1.msra.mxu0 0.0
  %331 = vmatprep.subr.mxu0 0.0
  %332 = vmatpush1.msra.mxu0 0.0
  %333 = vmatprep.subr.mxu0 0.0
  %334 = vmatpush1.msra.mxu0 0.0
  %335 = vmatprep.subr.mxu0 0.0
  %336 = vmatpush1.msra.mxu0 0.0
  %337 = vmatprep.mubr.f32.mxu0 0.0
  %338 = vmatmul.mubr.f32.gmra.mrb[0].mxu0 %v271
  %v339 = vpop.f32.mrb[0].mxu0
  %v340 = vadd.f32 %v268, %v339
  %v341 = vpop.f32.mrb[0].mxu0
  %342 = vdwg.mxu0
  %vm343 = vcmask 15360
  %v344 = vsel %vm343, %v340, -inf
  %345 = vmax.xlane.f32.xlu0 %v344
  %v346 = vpop.xlane.xlu0 %345
  %v347 = vsub.f32 %v340, %v346
  %v348 = vmul.f32 %v347, 1.442695
  %v349 = vpow.pop %v348
  %v350 = vsel %vm343, %v349, 0.0
  %351 = vadd.xlane.f32.xlu0 %v350
  %v352 = vpop.xlane.xlu0 %351
  %v353 = vrcp.pop %v352
  %v354 = vmul.f32 %v349, %v353
  %355 = vst.msk [vmem:[%s9] sm:$0xff] %vm343, %v354
  // Predicated region
  $region38: #{tpu_custom_call.1} parent=0 // pred_check
    _
  $region39: #{tpu_custom_call.1} parent=0 // pred_check_branch
    %357 = sbr.rel (0) target = $region41
  $region40: #{tpu_custom_call.1} parent=0 // pred_region
    _
  $region41: #{tpu_custom_call.1} parent=0 // pred_fallthru
    _
  // Predicated region
  $region42: #{tpu_custom_call.1} parent=0 // pred_check
    _
  $region43: #{tpu_custom_call.1} parent=0 // pred_check_branch
    %359 = sbr.rel (0) target = $region45
  $region44: #{tpu_custom_call.1} parent=0 // pred_region
    _
  $region45: #{tpu_custom_call.1} parent=0 // pred_fallthru
    _

</llo_original>
